<compile_context>
chip_gen: v5e
topology: v5e:2x2
jax: 0.10.0
libtpu: 0.0.40
codegen_flags: <defaults>
</compile_context>

<pallas_src>
import math
import functools

import jax
import jax.numpy as jnp
from jax.experimental import pallas as pl
from jax.experimental.pallas import tpu as pltpu


# ----------------------------------------------------------------------------
# Kernels
# ----------------------------------------------------------------------------
def _pe_add_kernel(x_ref, pe_ref, o_ref):
    # x_ref: (tS, B, D); pe_ref: (tS, D).  Broadcast pe over the batch (middle) axis.
    xf = x_ref[...].astype(jnp.float32)
    pef = pe_ref[...].astype(jnp.float32)
    o_ref[...] = (xf + pef[:, None, :]).astype(o_ref.dtype)


def _pe_add_dropout_kernel(x_ref, pe_ref, u_ref, o_ref, *, p):
    # Training-mode forward: (x + pe) then inverted dropout with keep-prob 1-p.
    # u_ref holds per-element f32 uniforms in [0, 1); drop where u < p.
    xf = x_ref[...].astype(jnp.float32)
    pef = pe_ref[...].astype(jnp.float32)
    y = xf + pef[:, None, :]
    keep = u_ref[...] >= jnp.float32(p)
    scale = jnp.float32(1.0 / (1.0 - p))              # applied in f32 (no bf16 rounding bias)
    o_ref[...] = jnp.where(keep, y * scale, jnp.zeros_like(y)).astype(o_ref.dtype)


# ----------------------------------------------------------------------------
# Parameter (buffer) construction — mirrors the PyTorch __init__ exactly.
# ----------------------------------------------------------------------------
def build_pe(d_model, max_len=5000, dtype=jnp.float32):
    position = jnp.arange(max_len, dtype=jnp.float32)[:, None]              # (L, 1)
    div_term = jnp.exp(
        jnp.arange(0, d_model, 2, dtype=jnp.float32) * (-math.log(10000.0) / d_model)
    )                                                                        # (D/2,)
    pe = jnp.zeros((max_len, d_model), dtype=jnp.float32)
    pe = pe.at[:, 0::2].set(jnp.sin(position * div_term))
    pe = pe.at[:, 1::2].set(jnp.cos(position * div_term))
    return pe.astype(dtype)                                                  # (L, D)


# ----------------------------------------------------------------------------
# Wrapper
# ----------------------------------------------------------------------------
def _choose_tile_rows(seq_len, row_bytes, target_bytes=1 << 20):
    """Pick a sequence tile (multiple of 8 rows) so one x tile is ~1 MiB."""
    rows = max(1, target_bytes // max(int(row_bytes), 1))
    rows = min(rows, seq_len)
    if rows < 8:
        return 8                      # partial block; Pallas masks the ragged edge
    return (rows // 8) * 8


def positional_encoding_forward(x, pe, *, p=0.1, training=False, seed=0):
    """x: (seq_len, batch, d_model); pe: (max_len, d_model)."""
    S, B, D = x.shape
    assert pe.shape[1] == D and pe.shape[0] >= S

    # One-time cast (normally done in build_pe) so pe DMA bytes match x's dtype.
    if pe.dtype != x.dtype:
        pe = pe.astype(x.dtype)

    use_dropout = bool(training) and p > 0.0
    if use_dropout and p >= 1.0:
        return jnp.zeros_like(x)      # torch nn.Dropout(p=1) zeroes everything

    itemsize = jnp.dtype(x.dtype).itemsize
    tS = _choose_tile_rows(S, B * D * itemsize)
    grid = (pl.cdiv(S, tS),)

    x_spec = pl.BlockSpec((tS, B, D), lambda i: (i, 0, 0))
    pe_spec = pl.BlockSpec((tS, D), lambda i: (i, 0))     # independent of batch -> no re-DMA
    out_spec = pl.BlockSpec((tS, B, D), lambda i: (i, 0, 0))

    # VMEM budget: double-buffered x + out (+ f32 mask) + pe, with 2x headroom,
    # clamped to 32 MiB so it is safe on v7x's smaller (64 MiB) physical VMEM.
    x_tile_bytes = tS * B * D * itemsize
    pe_tile_bytes = tS * D * jnp.dtype(pe.dtype).itemsize
    u_tile_bytes = tS * B * D * 4 if use_dropout else 0
    need = 2 * (2 * x_tile_bytes + u_tile_bytes + pe_tile_bytes)
    vmem_limit = int(min(max(2 * need, 16 * 1024 * 1024), 32 * 1024 * 1024))

    cparams = pltpu.CompilerParams(
        dimension_semantics=("parallel",),        # lets v7x shard the seq grid over 2 TCs
        vmem_limit_bytes=vmem_limit,
    )

    if not use_dropout:
        # eval-mode dropout is the identity
        return pl.pallas_call(
            _pe_add_kernel,
            out_shape=jax.ShapeDtypeStruct(x.shape, x.dtype),
            grid=grid,
            in_specs=[x_spec, pe_spec],
            out_specs=out_spec,
            compiler_params=cparams,
        )(x, pe)

    # TODO(synk): dropout mask uses host-side jax.random (threefry) instead of in-kernel
    # pltpu PRNG (not lowerable under the CPU interpret harness); RNG stream != torch's.
    u = jax.random.uniform(jax.random.PRNGKey(seed), x.shape, dtype=jnp.float32)
    kernel = functools.partial(_pe_add_dropout_kernel, p=float(p))
    return pl.pallas_call(
        kernel,
        out_shape=jax.ShapeDtypeStruct(x.shape, x.dtype),
        grid=grid,
        in_specs=[x_spec, pe_spec, x_spec],       # u tiled exactly like x
        out_specs=out_spec,
        compiler_params=cparams,
    )(x, pe, u)


# ----------------------------------------------------------------------------
# Main
# ----------------------------------------------------------------------------
if __name__ == "__main__":
    seq_len, batch, d_model = 8, 2, 32
    key = jax.random.PRNGKey(0)
    x = jax.random.normal(key, (seq_len, batch, d_model), dtype=jnp.float32)

    pe = build_pe(d_model, max_len=5000, dtype=x.dtype)
    ref = x + pe[:seq_len][:, None, :]

    # Eval-mode forward (dropout == identity): must match reference exactly.
    out_eval = positional_encoding_forward(x, pe, p=0.1, training=False)
    out_eval = jax.block_until_ready(out_eval)
    assert out_eval.shape == x.shape and out_eval.dtype == x.dtype
    assert jnp.allclose(out_eval, ref, atol=1e-6, rtol=1e-6), "eval-mode mismatch"

    # Training-mode forward: deterministic host-side mask -> exact expected output.
    p_drop, seed = 0.1, 1234
    out_train = positional_encoding_forward(x, pe, p=p_drop, training=True, seed=seed)
    out_train = jax.block_until_ready(out_train)
    u = jax.random.uniform(jax.random.PRNGKey(seed), x.shape, dtype=jnp.float32)
    expected = jnp.where(u >= p_drop, ref / (1.0 - p_drop), 0.0)
    assert out_train.shape == x.shape and out_train.dtype == x.dtype
    assert jnp.allclose(out_train, expected, atol=1e-5, rtol=1e-5), "train-mode mismatch"

    print("KERNEL_OK")
</pallas_src>

<mosaic_0001>
module attributes {stable_mosaic.version = 11 : i64} {
  func.func @_pe_add_kernel(%arg0: i32, %arg1: memref<8x2x32xf32, #tpu.memory_space<vmem>>, %arg2: memref<8x32xf32, #tpu.memory_space<vmem>>, %arg3: memref<8x2x32xf32, #tpu.memory_space<vmem>>) attributes {dimension_semantics = [#tpu.dimension_semantics<parallel>], iteration_bounds = array<i64: 1>, scalar_prefetch = 0 : i64, scratch_operands = 0 : i64, tpu.core_type = #tpu.core_type<tc>, window_params = [{transform_indices = @transform_0, window_bounds = array<i64: 8, 2, 32>}, {transform_indices = @transform_1, window_bounds = array<i64: 8, 32>}, {transform_indices = @transform_2, window_bounds = array<i64: 8, 2, 32>}]} {
    %c0 = arith.constant 0 : index
    %c0_0 = arith.constant 0 : index
    %c0_1 = arith.constant 0 : index
    %0 = vector.load %arg1[%c0, %c0_0, %c0_1] : memref<8x2x32xf32, #tpu.memory_space<vmem>>, vector<8x2x32xf32>
    %c0_2 = arith.constant 0 : index
    %c0_3 = arith.constant 0 : index
    %1 = vector.load %arg2[%c0_2, %c0_3] : memref<8x32xf32, #tpu.memory_space<vmem>>, vector<8x32xf32>
    %2 = vector.shape_cast %1 : vector<8x32xf32> to vector<8x1x32xf32>
    %3 = vector.broadcast %2 : vector<8x1x32xf32> to vector<8x2x32xf32>
    %4 = arith.addf %0, %3 : vector<8x2x32xf32>
    %c0_4 = arith.constant 0 : index
    %c0_5 = arith.constant 0 : index
    %c0_6 = arith.constant 0 : index
    %5 = vector.load %arg3[%c0_4, %c0_5, %c0_6] : memref<8x2x32xf32, #tpu.memory_space<vmem>>, vector<8x2x32xf32>
    tpu.vector_store %arg3[%c0_4, %c0_5, %c0_6], %4 {strides = array<i32>} : memref<8x2x32xf32, #tpu.memory_space<vmem>>, vector<8x2x32xf32>,
    return
  }
  func.func @transform_0(%arg0: i32) -> (i32, i32, i32) {
    %c0_i32 = arith.constant 0 : i32
    %c0_i32_0 = arith.constant 0 : i32
    %c0_i32_1 = arith.constant 0 : i32
    return %arg0, %c0_i32, %c0_i32_0 : i32, i32, i32
  }
  func.func @transform_1(%arg0: i32) -> (i32, i32) {
    %c0_i32 = arith.constant 0 : i32
    %c0_i32_0 = arith.constant 0 : i32
    return %arg0, %c0_i32 : i32, i32
  }
  func.func @transform_2(%arg0: i32) -> (i32, i32, i32) {
    %c0_i32 = arith.constant 0 : i32
    %c0_i32_0 = arith.constant 0 : i32
    %c0_i32_1 = arith.constant 0 : i32
    return %arg0, %c0_i32, %c0_i32_0 : i32, i32, i32
  }
}

</mosaic_0001>

<llo_original>
// kernel: tpu_custom_call.1
$region0: #{tpu_custom_call.1}
  #allocation0 [shape = 'u32[]', space=smem, size = 0x4, offset = 0x4, fixed_abs, tag = 'smem constant byte address 0x4 - core index']
  #allocation1 [shape = 'u32[72,128]{1,0:T(1,128)}', space=vmem, size = 0x9000, scoped, tag = 'internal scratch']
  %s0 = inlined_call_operand.vmem [shape: f32[8,2,32], index: 0, kind: input, shape index: {}]
  %s1 = inlined_call_operand.vmem [shape: f32[5000,32], index: 1, kind: input, shape index: {}]
  %s2 = inlined_call_operand.hbm [shape: f32[8,2,32], index: 2, kind: output, shape index: {}]
  %s3 = sld [smem:[#allocation0]]
  $region18: #{tpu_custom_call.1} parent=0
    _
  %s5 = ssub.s32 1, %s3
  %s6 = scalar_select 0, %s5, %s3
  $region1: #{tpu_custom_call.1} parent=0
    #allocation2 [shape = 'u8[8192]{0}', space=vmem, size = 0x2000, scoped, tag = 'output window, operand 0, single buffered']
    #allocation3 [shape = 's32[1]{0}', space=sflag, size = 0x4, scoped, tag = 'scoped memory for tpu_custom_call.1']
    %7 = vsyncpa [#allocation3], 0
    // Predicated region
    $region2: #{tpu_custom_call.1} parent=1 // pred_check
      _
    $region3: #{tpu_custom_call.1} parent=1 // pred_check_branch
      %9 = sbr.rel (0) target = $region5
    $region4: #{tpu_custom_call.1} parent=1 // pred_region
      _
    $region5: #{tpu_custom_call.1} parent=1 // pred_fallthru
      _
    // Predicated region
    $region6: #{tpu_custom_call.1} parent=1 // pred_check
      _
    $region7: #{tpu_custom_call.1} parent=1 // pred_check_branch
      %11 = sbr.rel (0) target = $region9
    $region8: #{tpu_custom_call.1} parent=1 // pred_region
      _
    $region9: #{tpu_custom_call.1} parent=1 // pred_fallthru
      _
    %v12 = vld [vmem:[%s0] sm:$0x3]
    %v13 = vld [vmem:[%s0 + $0x2] sm:$0x3]
    %v14 = vld [vmem:[%s0 + $0x4] sm:$0x3]
    %v15 = vld [vmem:[%s0 + $0x6] sm:$0x3]
    %v16 = vld [vmem:[%s0 + $0x8] sm:$0x3]
    %v17 = vld [vmem:[%s0 + $0xa] sm:$0x3]
    %v18 = vld [vmem:[%s0 + $0xc] sm:$0x3]
    %v19 = vld [vmem:[%s0 + $0xe] sm:$0x3]
    %v20 = vld [vmem:[%s1] sm:$0xff]
    %v22 = vrot.slane %v20, 1
    %v23 = vrot.slane %v20, 2
    %v24 = vrot.slane %v20, 3
    %v25 = vrot.slane %v20, 4
    %v26 = vrot.slane %v20, 5
    %v27 = vrot.slane %v20, 6
    %v28 = vrot.slane %v20, 7
    %v29 = vperm.slane %v20, 0
    %v30 = vperm.slane %v22, 0
    %v31 = vperm.slane %v23, 0
    %v32 = vperm.slane %v24, 0
    %v33 = vperm.slane %v25, 0
    %v34 = vperm.slane %v26, 0
    %v35 = vperm.slane %v27, 0
    %v36 = vperm.slane %v28, 0
    %v45 = vadd.f32 %v12, %v29
    %v46 = vadd.f32 %v13, %v30
    %v47 = vadd.f32 %v14, %v31
    %v48 = vadd.f32 %v15, %v32
    %v49 = vadd.f32 %v16, %v33
    %v50 = vadd.f32 %v17, %v34
    %v51 = vadd.f32 %v18, %v35
    %v52 = vadd.f32 %v19, %v36
    %vm53 = vcmask 254976
    %54 = vst.msk [vmem:[#allocation2] sm:$0x3] %vm53, %v45
    %55 = vst.msk [vmem:[#allocation2 + $0x2] sm:$0x3] %vm53, %v46
    %56 = vst.msk [vmem:[#allocation2 + $0x4] sm:$0x3] %vm53, %v47
    %57 = vst.msk [vmem:[#allocation2 + $0x6] sm:$0x3] %vm53, %v48
    %58 = vst.msk [vmem:[#allocation2 + $0x8] sm:$0x3] %vm53, %v49
    %59 = vst.msk [vmem:[#allocation2 + $0xa] sm:$0x3] %vm53, %v50
    %60 = vst.msk [vmem:[#allocation2 + $0xc] sm:$0x3] %vm53, %v51
    %61 = vst.msk [vmem:[#allocation2 + $0xe] sm:$0x3] %vm53, %v52
    // Predicated region
    $region10: #{tpu_custom_call.1} parent=1 // pred_check
      _
    $region11: #{tpu_custom_call.1} parent=1 // pred_check_branch
      %63 = sbr.rel (0) target = $region13
    $region12: #{tpu_custom_call.1} parent=1 // pred_region
      %65 = vsyncadd [#allocation3], 0
      %s66 = sshll.u32 [#allocation2], 4
      %s67 = int_to_ptr.vmem [resolvable:$true] %s66
      %s68 = sshll.u32 %s2, 4
      %s69 = int_to_ptr.hbm [resolvable:$true] %s68
      %74 = dma.vmem_to_hbm [thread:$0]  %s67, 256, %s69, [#allocation3], 32, 32, 2
    $region13: #{tpu_custom_call.1} parent=1 // pred_fallthru
      _
    // Predicated region
    $region14: #{tpu_custom_call.1} parent=1 // pred_check
      _
    $region15: #{tpu_custom_call.1} parent=1 // pred_check_branch
      %76 = sbr.rel (0) target = $region17
    $region16: #{tpu_custom_call.1} parent=1 // pred_region
      %78 = dma.done [#allocation3], 256
    $region17: #{tpu_custom_call.1} parent=1 // pred_fallthru
      _
    %79 = vsyncpa [#allocation3], 1

</llo_original>
